<compile_context>
chip_gen: v7x
topology: tpu7x:2x2x1
jax: 0.10.0
libtpu: 0.0.40
codegen_flags: <defaults>
</compile_context>

<pallas_src>
import functools

import jax
import jax.numpy as jnp
from jax.experimental import pallas as pl
from jax.experimental.pallas import tpu as pltpu

_LANES = 128
_SUBLANES = 8
_TILE_ROWS_MAX = 8192                    # f32: 4 MiB per input per pipeline buffer
_MIN_KERNEL_ELEMS = _SUBLANES * _LANES   # below this the fused XLA path wins


def _round_up(v, m):
    return ((v + m - 1) // m) * m


def _cdiv(a, b):
    return (a + b - 1) // b


def _pick_tile_rows(rows):
    """Rows per grid step (always a multiple of 8)."""
    rows8 = _round_up(rows, _SUBLANES)
    if rows8 <= 4096:
        # Single step; per-step overhead is negligible at this size and
        # splitting further only shrinks the DMA blocks.
        return rows8
    # Guarantee >= 2 grid steps so both v7x TensorCores stream HBM, and cap
    # the per-step block at _TILE_ROWS_MAX rows.
    half = _round_up(_cdiv(rows8, 2), _SUBLANES)
    return min(half, _TILE_ROWS_MAX)


def _mse_partial_kernel(xh_ref, x_ref, out_ref, *, tile_rows, total_rows):
    """Per-tile (8, 128) partial sums of squared differences.

    The (tile_rows, 128) block is folded to (tile_rows//8, 8, 128) and summed
    over the leading axis: element-wise vreg adds only, and the (8, 128) store
    is an unmasked lane-dense vst.
    """
    groups = tile_rows // _SUBLANES

    def partial(masked):
        diff = xh_ref[...].astype(jnp.float32) - x_ref[...].astype(jnp.float32)
        sq = diff * diff
        if masked:
            # Rows past the true end of the array hold undefined padding; use
            # a select (not a multiply-by-mask) so NaN/Inf in the pad cannot
            # leak into the sum.
            row = (
                jax.lax.broadcasted_iota(jnp.int32, sq.shape, 0)
                + pl.program_id(0) * tile_rows
            )
            sq = jnp.where(row < total_rows, sq, jnp.float32(0.0))
        return jnp.sum(sq.reshape(groups, _SUBLANES, _LANES), axis=0)

    if total_rows % tile_rows == 0:
        out_ref[...] = partial(False)
    else:
        last_idx = pl.num_programs(0) - 1

        @pl.when(pl.program_id(0) != last_idx)
        def _():
            out_ref[...] = partial(False)

        @pl.when(pl.program_id(0) == last_idx)
        def _():
            out_ref[...] = partial(True)


def _sum_sq_diff_2d(xh2d, x2d):
    """sum((xh2d - x2d)**2) in f32 via a pipelined streaming kernel."""
    rows = xh2d.shape[0]
    tile_rows = _pick_tile_rows(rows)
    num_tiles = _cdiv(rows, tile_rows)

    itemsize_in = jnp.dtype(xh2d.dtype).itemsize + jnp.dtype(x2d.dtype).itemsize
    tile_in_bytes = tile_rows * _LANES * itemsize_in
    # Double-buffered inputs + tiny outputs + headroom; floor at the 32 MiB
    # v6e/v7x scoped default (this raises v5e's 16 MiB default), cap well
    # under v7x's 64 MiB physical VMEM per TensorCore.
    vmem_limit_bytes = int(
        min(48 << 20, max(32 << 20, 2 * tile_in_bytes + (8 << 20)))
    )

    n = rows * _LANES
    partials = pl.pallas_call(
        functools.partial(
            _mse_partial_kernel, tile_rows=tile_rows, total_rows=rows
        ),
        out_shape=jax.ShapeDtypeStruct(
            (num_tiles * _SUBLANES, _LANES), jnp.float32
        ),
        grid=(num_tiles,),
        in_specs=[
            pl.BlockSpec((tile_rows, _LANES), lambda i: (i, 0)),
            pl.BlockSpec((tile_rows, _LANES), lambda i: (i, 0)),
        ],
        out_specs=pl.BlockSpec((_SUBLANES, _LANES), lambda i: (i, 0)),
        compiler_params=pltpu.CompilerParams(
            dimension_semantics=("parallel",),
            vmem_limit_bytes=vmem_limit_bytes,
        ),
        cost_estimate=pl.CostEstimate(
            flops=3 * n,
            transcendentals=0,
            bytes_accessed=n * itemsize_in + num_tiles * _SUBLANES * _LANES * 4,
        ),
    )(xh2d, x2d)

    return jnp.sum(partials)


def auto_estimator_loss(x_hat, x):
    """Returns {'loss': mean((x_hat - x) ** 2)} (scalar), like nn.MSELoss()."""
    assert x_hat.shape == x.shape, (x_hat.shape, x.shape)
    out_dtype = jnp.promote_types(x_hat.dtype, x.dtype)

    n = int(x_hat.size)
    n_aligned = (n // _LANES) * _LANES

    if n_aligned < _MIN_KERNEL_ELEMS:
        # Tiny (or empty) input: the fused XLA expression is cheaper than any
        # kernel launch.  (Empty input yields NaN, matching nn.MSELoss.)
        diff = x_hat.astype(jnp.float32) - x.astype(jnp.float32)
        return {"loss": jnp.mean(diff * diff).astype(out_dtype)}

    rows = n_aligned // _LANES
    if n == n_aligned:
        # Contiguous data: the 2-D view is a free reshape, no HBM copy.
        total = _sum_sq_diff_2d(
            x_hat.reshape(rows, _LANES), x.reshape(rows, _LANES)
        )
    else:
        # Misaligned element count: stream the aligned prefix through the
        # tuned kernel; only the <128-element tail goes to a tiny XLA expr.
        xh_flat = x_hat.reshape(-1)
        x_flat = x.reshape(-1)
        head = _sum_sq_diff_2d(
            xh_flat[:n_aligned].reshape(rows, _LANES),
            x_flat[:n_aligned].reshape(rows, _LANES),
        )
        tail_d = (
            xh_flat[n_aligned:].astype(jnp.float32)
            - x_flat[n_aligned:].astype(jnp.float32)
        )
        total = head + jnp.sum(tail_d * tail_d)

    # Divide by the exact Python count (avoids float32(n) rounding for huge n).
    loss = total / float(n)
    return {"loss": loss.astype(out_dtype)}


if __name__ == "__main__":
    key = jax.random.PRNGKey(0)
    k1, k2 = jax.random.split(key, 2)

    # Small reconstruction tensors: batch=2, channels=4, spatial=16x16.
    shape = (2, 4, 16, 16)
    x = jax.random.uniform(k1, shape, dtype=jnp.float32)
    x_hat = jax.random.uniform(k2, shape, dtype=jnp.float32)

    out = auto_estimator_loss(x_hat=x_hat, x=x)
    loss = jax.block_until_ready(out["loss"])

    ref = jnp.mean((x_hat - x) ** 2)
    assert loss.shape == ()
    assert jnp.allclose(loss, ref, atol=1e-5, rtol=1e-5), (loss, ref)

    print("KERNEL_OK")
</pallas_src>

<mosaic_0001>
module attributes {stable_mosaic.version = 11 : i64} {
  func.func @_mse_partial_kernel(%arg0: i32, %arg1: memref<16x128xf32, #tpu.memory_space<vmem>>, %arg2: memref<16x128xf32, #tpu.memory_space<vmem>>, %arg3: memref<8x128xf32, #tpu.memory_space<vmem>>) attributes {dimension_semantics = [#tpu.dimension_semantics<parallel>], iteration_bounds = array<i64: 1>, scalar_prefetch = 0 : i64, scratch_operands = 0 : i64, tpu.core_type = #tpu.core_type<tc>, window_params = [{transform_indices = @transform_0, window_bounds = array<i64: 16, 128>}, {transform_indices = @transform_1, window_bounds = array<i64: 16, 128>}, {transform_indices = @transform_2, window_bounds = array<i64: 8, 128>}]} {
    %c0 = arith.constant 0 : index
    %c0_0 = arith.constant 0 : index
    %0 = vector.load %arg1[%c0, %c0_0] : memref<16x128xf32, #tpu.memory_space<vmem>>, vector<16x128xf32>
    %c0_1 = arith.constant 0 : index
    %c0_2 = arith.constant 0 : index
    %1 = vector.load %arg2[%c0_1, %c0_2] : memref<16x128xf32, #tpu.memory_space<vmem>>, vector<16x128xf32>
    %2 = arith.subf %0, %1 : vector<16x128xf32>
    %3 = arith.mulf %2, %2 : vector<16x128xf32>
    %4 = vector.shape_cast %3 : vector<16x128xf32> to vector<2x8x128xf32>
    %cst = arith.constant dense<0.000000e+00> : vector<8x128xf32>
    %5 = vector.multi_reduction <add>, %4, %cst [0] : vector<2x8x128xf32> to vector<8x128xf32>
    %c0_3 = arith.constant 0 : index
    %c0_4 = arith.constant 0 : index
    %6 = vector.load %arg3[%c0_3, %c0_4] : memref<8x128xf32, #tpu.memory_space<vmem>>, vector<8x128xf32>
    tpu.vector_store %arg3[%c0_3, %c0_4], %5 {strides = array<i32>} : memref<8x128xf32, #tpu.memory_space<vmem>>, vector<8x128xf32>,
    return
  }
  func.func @transform_0(%arg0: i32) -> (i32, i32) {
    %c0_i32 = arith.constant 0 : i32
    %c0_i32_0 = arith.constant 0 : i32
    return %arg0, %c0_i32 : i32, i32
  }
  func.func @transform_1(%arg0: i32) -> (i32, i32) {
    %c0_i32 = arith.constant 0 : i32
    %c0_i32_0 = arith.constant 0 : i32
    return %arg0, %c0_i32 : i32, i32
  }
  func.func @transform_2(%arg0: i32) -> (i32, i32) {
    %c0_i32 = arith.constant 0 : i32
    %c0_i32_0 = arith.constant 0 : i32
    return %arg0, %c0_i32 : i32, i32
  }
}

</mosaic_0001>

<llo_original>
// kernel: tpu_custom_call.1
$region0: #{tpu_custom_call.1}
  #allocation0 [shape = 'u32[]', space=smem, size = 0x4, offset = 0x4, fixed_abs, tag = 'smem constant byte address 0x4 - core index']
  #allocation1 [shape = 'u32[144,128]{1,0:T(1,128)}', space=vmem, size = 0x12000, scoped, tag = 'internal scratch']
  %s0 = inlined_call_operand.hbm [shape: f32[16,128], index: 0, kind: input, shape index: {}]
  %s1 = inlined_call_operand.hbm [shape: f32[16,128], index: 1, kind: input, shape index: {}]
  %s2 = inlined_call_operand.hbm [shape: f32[8,128], index: 2, kind: output, shape index: {}]
  %s3 = sld [smem:[#allocation0]]
  $region26: #{tpu_custom_call.1} parent=0
    _
  %s5 = ssub.s32 1, %s3
  %s6 = scalar_select 0, %s5, %s3
  $region1: #{tpu_custom_call.1} parent=0
    #allocation2 [shape = 'u8[8192]{0}', space=vmem, size = 0x2000, scoped, tag = 'input window, operand 0, single buffered']
    #allocation3 [shape = 's32[1]{0}', space=sflag, size = 0x4, scoped, tag = 'scoped memory for tpu_custom_call.1']
    #allocation4 [shape = 's32[1]{0}', space=sflag, size = 0x4, scoped, tag = 'scoped memory for tpu_custom_call.1']
    #allocation5 [shape = 'u8[8192]{0}', space=vmem, size = 0x2000, scoped, tag = 'input window, operand 1, single buffered']
    #allocation6 [shape = 's32[1]{0}', space=sflag, size = 0x4, scoped, tag = 'scoped memory for tpu_custom_call.1']
    #allocation7 [shape = 'u8[4096]{0}', space=vmem, size = 0x1000, scoped, tag = 'output window, operand 0, single buffered']
    %7 = vsyncpa [#allocation3], 0
    %8 = vsyncpa [#allocation6], 0
    %9 = vsyncpa [#allocation4], 0
    // Predicated region
    $region2: #{tpu_custom_call.1} parent=1 // pred_check
      _
    $region3: #{tpu_custom_call.1} parent=1 // pred_check_branch
      %11 = sbr.rel (0) target = $region5
    $region4: #{tpu_custom_call.1} parent=1 // pred_region
      %s13 = ssub.s32 256, 256
      %14 = vsyncadd [#allocation3], %s13
      %s15 = sshll.u32 [#allocation2], 4
      %s16 = int_to_ptr.vmem [resolvable:$true] %s15
      %21 = dma.hbm_to_vmem [thread:$0]  %s0, 256, %s16, [#allocation3], 128, 128, 8
    $region5: #{tpu_custom_call.1} parent=1 // pred_fallthru
      _
    // Predicated region
    $region6: #{tpu_custom_call.1} parent=1 // pred_check
      _
    $region7: #{tpu_custom_call.1} parent=1 // pred_check_branch
      %23 = sbr.rel (0) target = $region9
    $region8: #{tpu_custom_call.1} parent=1 // pred_region
      %s25 = ssub.s32 256, 256
      %26 = vsyncadd [#allocation6], %s25
      %s27 = sshll.u32 [#allocation5], 4
      %s28 = int_to_ptr.vmem [resolvable:$true] %s27
      %33 = dma.hbm_to_vmem [thread:$0]  %s1, 256, %s28, [#allocation6], 128, 128, 8
    $region9: #{tpu_custom_call.1} parent=1 // pred_fallthru
      _
    // Predicated region
    $region10: #{tpu_custom_call.1} parent=1 // pred_check
      _
    $region11: #{tpu_custom_call.1} parent=1 // pred_check_branch
      %35 = sbr.rel (0) target = $region13
    $region12: #{tpu_custom_call.1} parent=1 // pred_region
      %36 = dma.done [#allocation3], 256
    $region13: #{tpu_custom_call.1} parent=1 // pred_fallthru
      _
    // Predicated region
    $region14: #{tpu_custom_call.1} parent=1 // pred_check
      _
    $region15: #{tpu_custom_call.1} parent=1 // pred_check_branch
      %38 = sbr.rel (0) target = $region17
    $region16: #{tpu_custom_call.1} parent=1 // pred_region
      %39 = dma.done [#allocation6], 256
    $region17: #{tpu_custom_call.1} parent=1 // pred_fallthru
      _
    %v40 = vld [vmem:[#allocation2] sm:$0xff]
    %v41 = vld [vmem:[#allocation2 + $0x8] sm:$0xff]
    %v42 = vld [vmem:[#allocation5] sm:$0xff]
    %v43 = vld [vmem:[#allocation5 + $0x8] sm:$0xff]
    %v44 = vsub.f32 %v40, %v42
    %v45 = vsub.f32 %v41, %v43
    %v46 = vmul.f32 %v44, %v44
    %v47 = vmul.f32 %v45, %v45
    %v48 = vadd.f32 %v46, %v47
    %49 = vst [vmem:[#allocation7] sm:$0xff] %v48
    // Predicated region
    $region18: #{tpu_custom_call.1} parent=1 // pred_check
      _
    $region19: #{tpu_custom_call.1} parent=1 // pred_check_branch
      %51 = sbr.rel (0) target = $region21
    $region20: #{tpu_custom_call.1} parent=1 // pred_region
      %s53 = ssub.s32 128, 128
      %54 = vsyncadd [#allocation4], %s53
      %s56 = sshll.u32 [#allocation7], 4
      %s57 = int_to_ptr.vmem [resolvable:$true] %s56
      %59 = dma.vmem_to_hbm [thread:$0]  %s57, 128, %s2, [#allocation4]
    $region21: #{tpu_custom_call.1} parent=1 // pred_fallthru
      _
    // Predicated region
    $region22: #{tpu_custom_call.1} parent=1 // pred_check
      _
    $region23: #{tpu_custom_call.1} parent=1 // pred_check_branch
      %61 = sbr.rel (0) target = $region25
    $region24: #{tpu_custom_call.1} parent=1 // pred_region
      %62 = dma.done [#allocation4], 128
    $region25: #{tpu_custom_call.1} parent=1 // pred_fallthru
      _
    %63 = vsyncpa [#allocation3], 1
    %64 = vsyncpa [#allocation6], 1
    %65 = vsyncpa [#allocation4], 1

</llo_original>
